<compile_context>
chip_gen: v7x
topology: tpu7x:2x2x1
jax: 0.10.0
libtpu: 0.0.40
codegen_flags: <defaults>
</compile_context>

<pallas_src>
import jax
import jax.numpy as jnp
from jax.experimental import pallas as pl
from jax.experimental.pallas import tpu as pltpu

_LANE = 128
_SUBLANE = 8
_MAX_TB = 2048   # max batch rows per grid step


def _round_up(x, m):
    return (x + m - 1) // m * m


# ---------------------------------------------------------------------------
# Fused Pallas kernel (batch-on-lanes / transposed orientation).
#   x_ref   : (TB, K)      input tile (K = timesteps * in_channels)
#   w1t_ref : (Hp, K)      pre-folded (embed + fc1) weight, transposed, H padded
#   b1t_ref : (Hp, 1)      fused bias (column)
#   w2t_ref : (Hp, Hp)     fc2 weight, transposed, padded
#   b2t_ref : (Hp, 1)
#   wot_ref : (8, Hp)      output weight, transposed, out-dim padded 1 -> 8
#   bo_ref  : (1, 1)       output bias
#   o_ref   : (1, 1, TB)   sigmoid(logits) for the TB batch rows (lane-dense)
# ---------------------------------------------------------------------------
def _classifier_kernel(x_ref, w1t_ref, b1t_ref, w2t_ref, b2t_ref, wot_ref,
                       bo_ref, o_ref):
    cdt = w2t_ref.dtype   # matmul operand dtype (f32 or bf16)

    # fc1 (with embedding folded in): contract K on both operands -> (Hp, TB)
    h1 = jax.lax.dot_general(
        w1t_ref[...], x_ref[...],
        dimension_numbers=(((1,), (1,)), ((), ())),
        preferred_element_type=jnp.float32)
    h1 = jnp.maximum(h1 + b1t_ref[...], 0.0).astype(cdt)

    # fc2: (Hp, Hp) @ (Hp, TB) -> (Hp, TB)
    h2 = jnp.dot(w2t_ref[...], h1, preferred_element_type=jnp.float32)
    h2 = jnp.maximum(h2 + b2t_ref[...], 0.0).astype(cdt)

    # output layer: (8, Hp) @ (Hp, TB) -> (8, TB); only row 0 is real.
    out8 = jnp.dot(wot_ref[...], h2, preferred_element_type=jnp.float32)
    o_ref[...] = jax.nn.sigmoid(out8[0:1, :] + bo_ref[...])[None]


def _fused_head_call(x2d, w1t, b1t, w2t, b2t, wot, bo, tb):
    bp, k = x2d.shape
    hp = w2t.shape[0]
    no8 = wot.shape[0]
    n_steps = bp // tb

    x_bytes = jnp.dtype(x2d.dtype).itemsize
    w_bytes = jnp.dtype(w1t.dtype).itemsize
    flops = 2 * bp * (k * hp + hp * hp + hp * no8)
    bytes_accessed = (bp * k * x_bytes + bp * 4
                      + (hp * k + hp * hp + no8 * hp) * w_bytes
                      + (2 * hp + 1) * 4)

    return pl.pallas_call(
        _classifier_kernel,
        out_shape=jax.ShapeDtypeStruct((n_steps, 1, tb), jnp.float32),
        grid=(n_steps,),
        in_specs=[
            pl.BlockSpec((tb, k), lambda i: (i, 0)),     # x tile (pipelined over batch)
            pl.BlockSpec((hp, k), lambda i: (0, 0)),     # fused embed+fc1 weight (resident)
            pl.BlockSpec((hp, 1), lambda i: (0, 0)),     # fused bias
            pl.BlockSpec((hp, hp), lambda i: (0, 0)),    # fc2 weight
            pl.BlockSpec((hp, 1), lambda i: (0, 0)),     # fc2 bias
            pl.BlockSpec((no8, hp), lambda i: (0, 0)),   # output weight (8 x Hp)
            pl.BlockSpec((1, 1), lambda i: (0, 0)),      # output bias
        ],
        out_specs=pl.BlockSpec((1, 1, tb), lambda i: (i, 0, 0)),
        compiler_params=pltpu.CompilerParams(
            dimension_semantics=("parallel",)),
        cost_estimate=pl.CostEstimate(
            flops=int(flops),
            transcendentals=int(bp),
            bytes_accessed=int(bytes_accessed)),
    )(x2d, w1t, b1t, w2t, b2t, wot, bo)


# ---------------------------------------------------------------------------
# Batch tile selection: big tiles (512-2048 rows), balanced so the last tile
# isn't nearly empty, and >= 2 grid steps for large B (v7x megacore).
# ---------------------------------------------------------------------------
def _pick_batch_tile(b):
    if b >= 1024:
        n_steps = max(2, pl.cdiv(b, _MAX_TB))
        return _round_up(pl.cdiv(b, n_steps), _LANE)
    return _round_up(max(b, 1), _SUBLANE)


# ---------------------------------------------------------------------------
# Parameter construction (deterministic, synthetic) + algebraic folding
# ---------------------------------------------------------------------------
def _init_linear(key, in_dim, out_dim):
    # Mimic nn.Linear's uniform(-1/sqrt(in), 1/sqrt(in)); stored as (in, out).
    kw, kb = jax.random.split(key)
    bound = 1.0 / float(in_dim) ** 0.5
    w = jax.random.uniform(kw, (in_dim, out_dim), jnp.float32, -bound, bound)
    b = jax.random.uniform(kb, (1, out_dim), jnp.float32, -bound, bound)
    return w, b


def _fuse_embed_fc1(w_in, b_in, w1, b1, timesteps):
    # emb.reshape(B, T*E) @ W1  ==  x.reshape(B, T*C) @ W_fused + b_extra
    c, e = w_in.shape
    hdim = w1.shape[1]
    w1_r = w1.reshape(timesteps, e, hdim)                    # (T, E, H)
    w_fused = jnp.einsum("ce,teh->tch", w_in, w1_r).reshape(timesteps * c, hdim)
    b_fused = b1 + jnp.einsum("e,teh->h", b_in[0], w1_r)[None, :]
    return w_fused, b_fused


def _prep_kernel_params(w_fused, b_fused, w2, b2, wo, bo, hidden_dim):
    # Pad hidden dim to a lane-dense 128 multiple, pad the 1-wide output layer
    # to 8 rows, and pre-transpose everything for batch-on-lanes compute.
    hp = _round_up(hidden_dim, _LANE)
    dh = hp - hidden_dim
    w1t = jnp.pad(w_fused, ((0, 0), (0, dh))).T              # (Hp, K)
    b1t = jnp.pad(b_fused, ((0, 0), (0, dh))).T              # (Hp, 1)
    w2t = jnp.pad(w2, ((0, dh), (0, dh))).T                  # (Hp, Hp)
    b2t = jnp.pad(b2, ((0, 0), (0, dh))).T                   # (Hp, 1)
    wot = jnp.pad(wo, ((0, dh), (0, _SUBLANE - wo.shape[1]))).T   # (8, Hp)
    return w1t, b1t, w2t, b2t, wot, bo                       # bo: (1, 1)


def init_classifier_params(key, dataset_num, inchannels, embed_units, timesteps,
                           hidden_dim):
    keys = jax.random.split(key, dataset_num + 3)
    input_embed = [
        _init_linear(keys[i], inchannels[i], embed_units)
        for i in range(dataset_num)
    ]
    fc1 = _init_linear(keys[dataset_num], embed_units * timesteps, hidden_dim)
    fc2 = _init_linear(keys[dataset_num + 1], hidden_dim, hidden_dim)
    output = _init_linear(keys[dataset_num + 2], hidden_dim, 1)

    kernel_params = []
    for (w_in, b_in) in input_embed:
        w_fused, b_fused = _fuse_embed_fc1(w_in, b_in, fc1[0], fc1[1], timesteps)
        kernel_params.append(
            _prep_kernel_params(w_fused, b_fused, fc2[0], fc2[1],
                                output[0], output[1], hidden_dim))

    # TODO(synk): Output_embeding_list exists in the PyTorch module but is
    # never used in Classifier.forward(), so it is intentionally not built.
    return {
        "input_embed": input_embed,   # kept for reference / validation
        "fc1": fc1,
        "fc2": fc2,
        "output": output,
        "kernel_params": kernel_params,   # per dataset, pre-folded / padded / transposed
    }


# ---------------------------------------------------------------------------
# Forward (matches Classifier.forward semantics)
# ---------------------------------------------------------------------------
def classifier_forward(params, x, datasetid, use_bf16=False):
    # x: (B, T, C_in[datasetid]) float32  ->  (B, 1) float32
    B, T, C = x.shape
    w1t, b1t, w2t, b2t, wot, bo = params["kernel_params"][datasetid]

    x2d = x.reshape(B, T * C)
    if use_bf16:
        # bf16 matmul operands only; biases / ReLU / sigmoid stay f32 (v5e-safe).
        x2d = x2d.astype(jnp.bfloat16)
        w1t = w1t.astype(jnp.bfloat16)
        w2t = w2t.astype(jnp.bfloat16)
        wot = wot.astype(jnp.bfloat16)

    tb = _pick_batch_tile(B)
    bp = _round_up(B, tb)
    if bp != B:
        x2d = jnp.pad(x2d, ((0, bp - B), (0, 0)))

    out = _fused_head_call(x2d, w1t, b1t, w2t, b2t, wot, bo, tb)
    return out.reshape(-1)[:B].reshape(B, 1)


# ---------------------------------------------------------------------------
# Plain-JAX reference of the ORIGINAL (unfused) forward, for validation
# ---------------------------------------------------------------------------
def _reference_forward(params, x, datasetid):
    B, T, C = x.shape
    w_in, b_in = params["input_embed"][datasetid]
    emb = x.reshape(B * T, C) @ w_in + b_in
    h = emb.reshape(B, -1)
    w1, b1 = params["fc1"]
    w2, b2 = params["fc2"]
    wo, bo = params["output"]
    h = jnp.maximum(h @ w1 + b1, 0.0)
    h = jnp.maximum(h @ w2 + b2, 0.0)
    return jax.nn.sigmoid(h @ wo + bo)


# ---------------------------------------------------------------------------
# Demo
# ---------------------------------------------------------------------------
if __name__ == "__main__":
    # Synthetic args (matching the module's constructor)
    dataset_num = 2
    inchannels = [4, 6]
    input_embeding_units = 32
    timesteps = 8
    classfier_hidden_dim = 32

    key = jax.random.PRNGKey(0)
    pkey, xkey = jax.random.split(key)
    params = init_classifier_params(
        pkey, dataset_num, inchannels, input_embeding_units, timesteps,
        classfier_hidden_dim,
    )

    # Small-shape checks (f32 path, tight tolerance) on both datasets, plus a
    # non-multiple-of-8 batch to exercise batch padding.
    for datasetid, b in ((0, 2), (1, 2), (0, 20)):
        xkey, sub = jax.random.split(xkey)
        x = jax.random.normal(
            sub, (b, timesteps, inchannels[datasetid]), jnp.float32)
        out = jax.block_until_ready(classifier_forward(params, x, datasetid))
        ref = _reference_forward(params, x, datasetid)
        assert out.shape == (b, 1), out.shape
        assert jnp.all(jnp.isfinite(out))
        assert jnp.allclose(out, ref, atol=1e-5, rtol=1e-5), (datasetid, b)

    # Larger batch exercising the multi-step (pipelined / megacore) grid path.
    xkey, sub = jax.random.split(xkey)
    xb = jax.random.normal(sub, (1500, timesteps, inchannels[0]), jnp.float32)
    out = jax.block_until_ready(classifier_forward(params, xb, 0))
    ref = _reference_forward(params, xb, 0)
    assert out.shape == (1500, 1)
    assert jnp.allclose(out, ref, atol=1e-5, rtol=1e-5)

    # bf16 matmul-operand path (v6e/v7x bandwidth optimization), looser tolerance.
    out_bf16 = jax.block_until_ready(
        classifier_forward(params, xb, 0, use_bf16=True))
    assert out_bf16.shape == (1500, 1)
    assert jnp.all(jnp.isfinite(out_bf16))
    assert jnp.max(jnp.abs(out_bf16 - ref)) < 5e-2

    print("KERNEL_OK")
</pallas_src>

<mosaic_0001>
module attributes {stable_mosaic.version = 11 : i64} {
  func.func @_classifier_kernel(%arg0: i32, %arg1: memref<8x32xf32, #tpu.memory_space<vmem>>, %arg2: memref<128x32xf32, #tpu.memory_space<vmem>>, %arg3: memref<128x1xf32, #tpu.memory_space<vmem>>, %arg4: memref<128x128xf32, #tpu.memory_space<vmem>>, %arg5: memref<128x1xf32, #tpu.memory_space<vmem>>, %arg6: memref<8x128xf32, #tpu.memory_space<vmem>>, %arg7: memref<1x1xf32, #tpu.memory_space<vmem>>, %arg8: memref<1x1x8xf32, #tpu.memory_space<vmem>>) attributes {dimension_semantics = [#tpu.dimension_semantics<parallel>], iteration_bounds = array<i64: 1>, scalar_prefetch = 0 : i64, scratch_operands = 0 : i64, tpu.core_type = #tpu.core_type<tc>, window_params = [{transform_indices = @transform_0, window_bounds = array<i64: 8, 32>}, {pipeline_mode = #tpu.pipeline_mode<synchronous>, transform_indices = @transform_1, window_bounds = array<i64: 128, 32>}, {pipeline_mode = #tpu.pipeline_mode<synchronous>, transform_indices = @transform_2, window_bounds = array<i64: 128, 1>}, {pipeline_mode = #tpu.pipeline_mode<synchronous>, transform_indices = @transform_3, window_bounds = array<i64: 128, 128>}, {pipeline_mode = #tpu.pipeline_mode<synchronous>, transform_indices = @transform_4, window_bounds = array<i64: 128, 1>}, {pipeline_mode = #tpu.pipeline_mode<synchronous>, transform_indices = @transform_5, window_bounds = array<i64: 8, 128>}, {pipeline_mode = #tpu.pipeline_mode<synchronous>, transform_indices = @transform_6, window_bounds = array<i64: 1, 1>}, {transform_indices = @transform_7, window_bounds = array<i64: 1, 1, 8>}]} {
    %c0 = arith.constant 0 : index
    %c0_0 = arith.constant 0 : index
    %0 = vector.load %arg2[%c0, %c0_0] : memref<128x32xf32, #tpu.memory_space<vmem>>, vector<128x32xf32>
    %c0_1 = arith.constant 0 : index
    %c0_2 = arith.constant 0 : index
    %1 = vector.load %arg1[%c0_1, %c0_2] : memref<8x32xf32, #tpu.memory_space<vmem>>, vector<8x32xf32>
    %cst = arith.constant dense<0.000000e+00> : vector<128x8xf32>
    %2 = tpu.matmul %0, %1, %cst {dimension_numbers = #tpu.dot_dimension_numbers<[1], [1], [0], [0], [0, 0, 1, 0], [], []>} : vector<128x32xf32>, vector<8x32xf32>, vector<128x8xf32> -> vector<128x8xf32>
    %c0_3 = arith.constant 0 : index
    %c0_4 = arith.constant 0 : index
    %3 = vector.load %arg3[%c0_3, %c0_4] : memref<128x1xf32, #tpu.memory_space<vmem>>, vector<128x1xf32>
    %4 = vector.broadcast %3 : vector<128x1xf32> to vector<128x8xf32>
    %5 = arith.addf %2, %4 : vector<128x8xf32>
    %cst_5 = arith.constant 0.000000e+00 : f32
    %6 = vector.broadcast %cst_5 : f32 to vector<128x8xf32>
    %7 = arith.maximumf %5, %6 : vector<128x8xf32>
    %c0_6 = arith.constant 0 : index
    %c0_7 = arith.constant 0 : index
    %8 = vector.load %arg4[%c0_6, %c0_7] : memref<128x128xf32, #tpu.memory_space<vmem>>, vector<128x128xf32>
    %cst_8 = arith.constant dense<0.000000e+00> : vector<128x8xf32>
    %9 = tpu.matmul %8, %7, %cst_8 {dimension_numbers = #tpu.dot_dimension_numbers<[1], [0], [0], [1], [0, 0, 1, 1], [], []>} : vector<128x128xf32>, vector<128x8xf32>, vector<128x8xf32> -> vector<128x8xf32>
    %c0_9 = arith.constant 0 : index
    %c0_10 = arith.constant 0 : index
    %10 = vector.load %arg5[%c0_9, %c0_10] : memref<128x1xf32, #tpu.memory_space<vmem>>, vector<128x1xf32>
    %11 = vector.broadcast %10 : vector<128x1xf32> to vector<128x8xf32>
    %12 = arith.addf %9, %11 : vector<128x8xf32>
    %cst_11 = arith.constant 0.000000e+00 : f32
    %13 = vector.broadcast %cst_11 : f32 to vector<128x8xf32>
    %14 = arith.maximumf %12, %13 : vector<128x8xf32>
    %c0_12 = arith.constant 0 : index
    %c0_13 = arith.constant 0 : index
    %15 = vector.load %arg6[%c0_12, %c0_13] : memref<8x128xf32, #tpu.memory_space<vmem>>, vector<8x128xf32>
    %cst_14 = arith.constant dense<0.000000e+00> : vector<8x8xf32>
    %16 = tpu.matmul %15, %14, %cst_14 {dimension_numbers = #tpu.dot_dimension_numbers<[1], [0], [0], [1], [0, 0, 1, 1], [], []>} : vector<8x128xf32>, vector<128x8xf32>, vector<8x8xf32> -> vector<8x8xf32>
    %17 = vector.extract_strided_slice %16 {offsets = [0, 0], sizes = [1, 8], strides = [1, 1]} : vector<8x8xf32> to vector<1x8xf32>
    %c0_15 = arith.constant 0 : index
    %c0_16 = arith.constant 0 : index
    %18 = vector.load %arg7[%c0_15, %c0_16] : memref<1x1xf32, #tpu.memory_space<vmem>>, vector<1x1xf32>
    %19 = vector.broadcast %18 : vector<1x1xf32> to vector<1x8xf32>
    %20 = arith.addf %17, %19 : vector<1x8xf32>
    %21 = arith.negf %20 : vector<1x8xf32>
    %22 = math.exp %21 : vector<1x8xf32>
    %cst_17 = arith.constant 1.000000e+00 : f32
    %23 = vector.broadcast %cst_17 : f32 to vector<1x8xf32>
    %24 = arith.addf %23, %22 : vector<1x8xf32>
    %25 = arith.divf %23, %24 : vector<1x8xf32>
    %26 = vector.shape_cast %25 : vector<1x8xf32> to vector<1x1x8xf32>
    %c0_18 = arith.constant 0 : index
    %c0_19 = arith.constant 0 : index
    %c0_20 = arith.constant 0 : index
    %27 = vector.load %arg8[%c0_18, %c0_19, %c0_20] : memref<1x1x8xf32, #tpu.memory_space<vmem>>, vector<1x1x8xf32>
    tpu.vector_store %arg8[%c0_18, %c0_19, %c0_20], %26 {strides = array<i32>} : memref<1x1x8xf32, #tpu.memory_space<vmem>>, vector<1x1x8xf32>,
    return
  }
  func.func @transform_0(%arg0: i32) -> (i32, i32) {
    %c0_i32 = arith.constant 0 : i32
    %c0_i32_0 = arith.constant 0 : i32
    return %arg0, %c0_i32 : i32, i32
  }
  func.func @transform_1(%arg0: i32) -> (i32, i32) {
    %c0_i32 = arith.constant 0 : i32
    %c0_i32_0 = arith.constant 0 : i32
    %c0_i32_1 = arith.constant 0 : i32
    return %c0_i32, %c0_i32_0 : i32, i32
  }
  func.func @transform_2(%arg0: i32) -> (i32, i32) {
    %c0_i32 = arith.constant 0 : i32
    %c0_i32_0 = arith.constant 0 : i32
    %c0_i32_1 = arith.constant 0 : i32
    return %c0_i32, %c0_i32_0 : i32, i32
  }
  func.func @transform_3(%arg0: i32) -> (i32, i32) {
    %c0_i32 = arith.constant 0 : i32
    %c0_i32_0 = arith.constant 0 : i32
    %c0_i32_1 = arith.constant 0 : i32
    return %c0_i32, %c0_i32_0 : i32, i32
  }
  func.func @transform_4(%arg0: i32) -> (i32, i32) {
    %c0_i32 = arith.constant 0 : i32
    %c0_i32_0 = arith.constant 0 : i32
    %c0_i32_1 = arith.constant 0 : i32
    return %c0_i32, %c0_i32_0 : i32, i32
  }
  func.func @transform_5(%arg0: i32) -> (i32, i32) {
    %c0_i32 = arith.constant 0 : i32
    %c0_i32_0 = arith.constant 0 : i32
    %c0_i32_1 = arith.constant 0 : i32
    return %c0_i32, %c0_i32_0 : i32, i32
  }
  func.func @transform_6(%arg0: i32) -> (i32, i32) {
    %c0_i32 = arith.constant 0 : i32
    %c0_i32_0 = arith.constant 0 : i32
    %c0_i32_1 = arith.constant 0 : i32
    return %c0_i32, %c0_i32_0 : i32, i32
  }
  func.func @transform_7(%arg0: i32) -> (i32, i32, i32) {
    %c0_i32 = arith.constant 0 : i32
    %c0_i32_0 = arith.constant 0 : i32
    %c0_i32_1 = arith.constant 0 : i32
    return %arg0, %c0_i32, %c0_i32_0 : i32, i32, i32
  }
}

</mosaic_0001>

<llo_original>
// kernel: tpu_custom_call.1
$region0: #{tpu_custom_call.1}
  #allocation0 [shape = 'u32[]', space=smem, size = 0x4, offset = 0x4, fixed_abs, tag = 'smem constant byte address 0x4 - core index']
  #allocation1 [shape = 'u32[144,128]{1,0:T(1,128)}', space=vmem, size = 0x12000, scoped, tag = 'internal scratch']
  #allocation2 [shape = 'f32[1,1]{1,0:T(1,128)S(1)}', space=vmem, size = 0x200, scoped, tag = 'scoped memory for tpu_custom_call.1']
  %s0 = inlined_call_operand.vmem [shape: f32[8,32], index: 0, kind: input, shape index: {}]
  %s1 = inlined_call_operand.vmem [shape: f32[128,32], index: 1, kind: input, shape index: {}]
  %s2 = inlined_call_operand.vmem [shape: f32[128,1], index: 2, kind: input, shape index: {}]
  %s3 = inlined_call_operand.vmem [shape: f32[128,128], index: 3, kind: input, shape index: {}]
  %s4 = inlined_call_operand.vmem [shape: f32[128,1], index: 4, kind: input, shape index: {}]
  %s5 = inlined_call_operand.vmem [shape: f32[8,128], index: 5, kind: input, shape index: {}]
  %s6 = inlined_call_operand.<no memory space> [shape: f32[1,1], index: 6, kind: input, shape index: {}]
  %s7 = inlined_call_operand.hbm [shape: f32[1,1,8], index: 7, kind: output, shape index: {}]
  %s8 = sld [smem:[#allocation0]]
  $region38: #{tpu_custom_call.1} parent=0
    _
  %s10 = ssub.s32 1, %s8
  %s11 = scalar_select 0, %s10, %s8
  %v12 = vstv %s6
  %13 = vst [vmem:[#allocation2] sm:$0x1] %v12
  $region1: #{tpu_custom_call.1} parent=0
    #allocation3 [shape = 'u8[512]{0}', space=vmem, size = 0x400, scoped, tag = 'output window, operand 0, single buffered']
    #allocation4 [shape = 's32[1]{0}', space=sflag, size = 0x4, scoped, tag = 'scoped memory for tpu_custom_call.1']
    %14 = vsyncpa [#allocation4], 0
    // Predicated region
    $region2: #{tpu_custom_call.1} parent=1 // pred_check
      _
    $region3: #{tpu_custom_call.1} parent=1 // pred_check_branch
      %16 = sbr.rel (0) target = $region5
    $region4: #{tpu_custom_call.1} parent=1 // pred_region
      _
    $region5: #{tpu_custom_call.1} parent=1 // pred_fallthru
      _
    // Predicated region
    $region6: #{tpu_custom_call.1} parent=1 // pred_check
      _
    $region7: #{tpu_custom_call.1} parent=1 // pred_check_branch
      %18 = sbr.rel (0) target = $region9
    $region8: #{tpu_custom_call.1} parent=1 // pred_region
      _
    $region9: #{tpu_custom_call.1} parent=1 // pred_fallthru
      _
    // Predicated region
    $region10: #{tpu_custom_call.1} parent=1 // pred_check
      _
    $region11: #{tpu_custom_call.1} parent=1 // pred_check_branch
      %20 = sbr.rel (0) target = $region13
    $region12: #{tpu_custom_call.1} parent=1 // pred_region
      _
    $region13: #{tpu_custom_call.1} parent=1 // pred_fallthru
      _
    // Predicated region
    $region14: #{tpu_custom_call.1} parent=1 // pred_check
      _
    $region15: #{tpu_custom_call.1} parent=1 // pred_check_branch
      %22 = sbr.rel (0) target = $region17
    $region16: #{tpu_custom_call.1} parent=1 // pred_region
      _
    $region17: #{tpu_custom_call.1} parent=1 // pred_fallthru
      _
    // Predicated region
    $region18: #{tpu_custom_call.1} parent=1 // pred_check
      _
    $region19: #{tpu_custom_call.1} parent=1 // pred_check_branch
      %24 = sbr.rel (0) target = $region21
    $region20: #{tpu_custom_call.1} parent=1 // pred_region
      _
    $region21: #{tpu_custom_call.1} parent=1 // pred_fallthru
      _
    // Predicated region
    $region22: #{tpu_custom_call.1} parent=1 // pred_check
      _
    $region23: #{tpu_custom_call.1} parent=1 // pred_check_branch
      %26 = sbr.rel (0) target = $region25
    $region24: #{tpu_custom_call.1} parent=1 // pred_region
      _
    $region25: #{tpu_custom_call.1} parent=1 // pred_fallthru
      _
    // Predicated region
    $region26: #{tpu_custom_call.1} parent=1 // pred_check
      _
    $region27: #{tpu_custom_call.1} parent=1 // pred_check_branch
      %28 = sbr.rel (0) target = $region29
    $region28: #{tpu_custom_call.1} parent=1 // pred_region
      _
    $region29: #{tpu_custom_call.1} parent=1 // pred_fallthru
      _
    %v29 = vld [vmem:[%s1] sm:$0xff]
    %v30 = vld [vmem:[%s1 + $0x8] sm:$0xff]
    %v31 = vld [vmem:[%s1 + $0x10] sm:$0xff]
    %v32 = vld [vmem:[%s1 + $0x18] sm:$0xff]
    %v33 = vld [vmem:[%s1 + $0x20] sm:$0xff]
    %v34 = vld [vmem:[%s1 + $0x28] sm:$0xff]
    %v35 = vld [vmem:[%s1 + $0x30] sm:$0xff]
    %v36 = vld [vmem:[%s1 + $0x38] sm:$0xff]
    %v37 = vld [vmem:[%s1 + $0x40] sm:$0xff]
    %v38 = vld [vmem:[%s1 + $0x48] sm:$0xff]
    %v39 = vld [vmem:[%s1 + $0x50] sm:$0xff]
    %v40 = vld [vmem:[%s1 + $0x58] sm:$0xff]
    %v41 = vld [vmem:[%s1 + $0x60] sm:$0xff]
    %v42 = vld [vmem:[%s1 + $0x68] sm:$0xff]
    %v43 = vld [vmem:[%s1 + $0x70] sm:$0xff]
    %v44 = vld [vmem:[%s1 + $0x78] sm:$0xff]
    %v45 = vld [vmem:[%s0] sm:$0xff]
    %v46 = vld [vmem:[%s2] sm:$0xff]
    %v47 = vld [vmem:[%s2 + $0x8] sm:$0xff]
    %v48 = vld [vmem:[%s2 + $0x10] sm:$0xff]
    %v49 = vld [vmem:[%s2 + $0x18] sm:$0xff]
    %v50 = vld [vmem:[%s2 + $0x20] sm:$0xff]
    %v51 = vld [vmem:[%s2 + $0x28] sm:$0xff]
    %v52 = vld [vmem:[%s2 + $0x30] sm:$0xff]
    %v53 = vld [vmem:[%s2 + $0x38] sm:$0xff]
    %v54 = vld [vmem:[%s2 + $0x40] sm:$0xff]
    %v55 = vld [vmem:[%s2 + $0x48] sm:$0xff]
    %v56 = vld [vmem:[%s2 + $0x50] sm:$0xff]
    %v57 = vld [vmem:[%s2 + $0x58] sm:$0xff]
    %v58 = vld [vmem:[%s2 + $0x60] sm:$0xff]
    %v59 = vld [vmem:[%s2 + $0x68] sm:$0xff]
    %v60 = vld [vmem:[%s2 + $0x70] sm:$0xff]
    %v61 = vld [vmem:[%s2 + $0x78] sm:$0xff]
    %63 = vset.pattern.permute.xlu0 0
    %64 = vperm.xlu0 %63, %v46
    %v65 = vpop.permute.xlu0 %64
    %68 = vset.pattern.permute.xlu0 0
    %69 = vperm.xlu0 %68, %v47
    %v70 = vpop.permute.xlu0 %69
    %73 = vset.pattern.permute.xlu0 0
    %74 = vperm.xlu0 %73, %v48
    %v75 = vpop.permute.xlu0 %74
    %78 = vset.pattern.permute.xlu0 0
    %79 = vperm.xlu0 %78, %v49
    %v80 = vpop.permute.xlu0 %79
    %83 = vset.pattern.permute.xlu0 0
    %84 = vperm.xlu0 %83, %v50
    %v85 = vpop.permute.xlu0 %84
    %88 = vset.pattern.permute.xlu0 0
    %89 = vperm.xlu0 %88, %v51
    %v90 = vpop.permute.xlu0 %89
    %93 = vset.pattern.permute.xlu0 0
    %94 = vperm.xlu0 %93, %v52
    %v95 = vpop.permute.xlu0 %94
    %98 = vset.pattern.permute.xlu0 0
    %99 = vperm.xlu0 %98, %v53
    %v100 = vpop.permute.xlu0 %99
    %103 = vset.pattern.permute.xlu0 0
    %104 = vperm.xlu0 %103, %v54
    %v105 = vpop.permute.xlu0 %104
    %108 = vset.pattern.permute.xlu0 0
    %109 = vperm.xlu0 %108, %v55
    %v110 = vpop.permute.xlu0 %109
    %113 = vset.pattern.permute.xlu0 0
    %114 = vperm.xlu0 %113, %v56
    %v115 = vpop.permute.xlu0 %114
    %118 = vset.pattern.permute.xlu0 0
    %119 = vperm.xlu0 %118, %v57
    %v120 = vpop.permute.xlu0 %119
    %123 = vset.pattern.permute.xlu0 0
    %124 = vperm.xlu0 %123, %v58
    %v125 = vpop.permute.xlu0 %124
    %128 = vset.pattern.permute.xlu0 0
    %129 = vperm.xlu0 %128, %v59
    %v130 = vpop.permute.xlu0 %129
    %133 = vset.pattern.permute.xlu0 0
    %134 = vperm.xlu0 %133, %v60
    %v135 = vpop.permute.xlu0 %134
    %138 = vset.pattern.permute.xlu0 0
    %139 = vperm.xlu0 %138, %v61
    %v140 = vpop.permute.xlu0 %139
    %vm142 = vcmask 261120
    %v144 = vsel %vm142, %v29, 0
    %v147 = vsel %vm142, %v30, 0
    %v150 = vsel %vm142, %v31, 0
    %v153 = vsel %vm142, %v32, 0
    %v156 = vsel %vm142, %v33, 0
    %v159 = vsel %vm142, %v34, 0
    %v162 = vsel %vm142, %v35, 0
    %v165 = vsel %vm142, %v36, 0
    %v168 = vsel %vm142, %v37, 0
    %v171 = vsel %vm142, %v38, 0
    %v174 = vsel %vm142, %v39, 0
    %v177 = vsel %vm142, %v40, 0
    %v180 = vsel %vm142, %v41, 0
    %v183 = vsel %vm142, %v42, 0
    %v186 = vsel %vm142, %v43, 0
    %v189 = vsel %vm142, %v44, 0
    %v192 = vsel %vm142, %v45, 0
    %194 = vmatprep.subr.mxu0 0.0
    %195 = vmatpush1.xpose.msra.mxu0 %v192
    %196 = vmatprep.subr.mxu0 0.0
    %197 = vmatpush1.xpose.msra.mxu0 0.0
    %198 = vmatprep.subr.mxu0 0.0
    %199 = vmatpush1.xpose.msra.mxu0 0.0
    %200 = vmatprep.subr.mxu0 0.0
    %201 = vmatpush1.xpose.msra.mxu0 0.0
    %202 = vmatprep.subr.mxu0 0.0
    %203 = vmatpush1.xpose.msra.mxu0 0.0
    %204 = vmatprep.subr.mxu0 0.0
    %205 = vmatpush1.xpose.msra.mxu0 0.0
    %206 = vmatprep.subr.mxu0 0.0
    %207 = vmatpush1.xpose.msra.mxu0 0.0
    %208 = vmatprep.subr.mxu0 0.0
    %209 = vmatpush1.xpose.msra.mxu0 0.0
    %210 = vmatprep.subr.mxu0 0.0
    %211 = vmatpush1.xpose.msra.mxu0 0.0
    %212 = vmatprep.subr.mxu0 0.0
    %213 = vmatpush1.xpose.msra.mxu0 0.0
    %214 = vmatprep.subr.mxu0 0.0
    %215 = vmatpush1.xpose.msra.mxu0 0.0
    %216 = vmatprep.subr.mxu0 0.0
    %217 = vmatpush1.xpose.msra.mxu0 0.0
    %218 = vmatprep.subr.mxu0 0.0
    %219 = vmatpush1.xpose.msra.mxu0 0.0
    %220 = vmatprep.subr.mxu0 0.0
    %221 = vmatpush1.xpose.msra.mxu0 0.0
    %222 = vmatprep.subr.mxu0 0.0
    %223 = vmatpush1.xpose.msra.mxu0 0.0
    %224 = vmatprep.subr.mxu0 0.0
    %225 = vmatpush1.xpose.msra.mxu0 0.0
    %226 = vmatprep.subr.mxu0 0.0
    %227 = vmatpush1.xpose.msra.mxu0 0.0
    %228 = vmatprep.subr.mxu0 0.0
    %229 = vmatpush1.xpose.msra.mxu0 0.0
    %230 = vmatprep.subr.mxu0 0.0
    %231 = vmatpush1.xpose.msra.mxu0 0.0
    %232 = vmatprep.subr.mxu0 0.0
    %233 = vmatpush1.xpose.msra.mxu0 0.0
    %234 = vmatprep.subr.mxu0 0.0
    %235 = vmatpush1.xpose.msra.mxu0 0.0
    %236 = vmatprep.subr.mxu0 0.0
    %237 = vmatpush1.xpose.msra.mxu0 0.0
    %238 = vmatprep.subr.mxu0 0.0
    %239 = vmatpush1.xpose.msra.mxu0 0.0
    %240 = vmatprep.subr.mxu0 0.0
    %241 = vmatpush1.xpose.msra.mxu0 0.0
    %242 = vmatprep.subr.mxu0 0.0
    %243 = vmatpush1.xpose.msra.mxu0 0.0
    %244 = vmatprep.subr.mxu0 0.0
    %245 = vmatpush1.xpose.msra.mxu0 0.0
    %246 = vmatprep.subr.mxu0 0.0
    %247 = vmatpush1.xpose.msra.mxu0 0.0
    %248 = vmatprep.subr.mxu0 0.0
    %249 = vmatpush1.xpose.msra.mxu0 0.0
    %250 = vmatprep.subr.mxu0 0.0
    %251 = vmatpush1.xpose.msra.mxu0 0.0
    %252 = vmatprep.subr.mxu0 0.0
    %253 = vmatpush1.xpose.msra.mxu0 0.0
    %254 = vmatprep.subr.mxu0 0.0
    %255 = vmatpush1.xpose.msra.mxu0 0.0
    %256 = vmatprep.subr.mxu0 0.0
    %257 = vmatpush1.xpose.msra.mxu0 0.0
    %258 = vmatprep.mubr.f32.mxu0 0.0
    %259 = vmatmul.mubr.f32.gmra.mrb[0].mxu0 %v144
    %v260 = vpop.f32.mrb[0].mxu0
    %v261 = vadd.f32 %v65, %v260
    %v262 = vpop.f32.mrb[0].mxu0
    %263 = vmatprep.mubr.f32.mxu0 0.0
    %264 = vmatmul.mubr.f32.gmra.mrb[0].mxu0 %v147
    %v265 = vpop.f32.mrb[0].mxu0
    %v266 = vadd.f32 %v70, %v265
    %v267 = vpop.f32.mrb[0].mxu0
    %268 = vmatprep.mubr.f32.mxu0 0.0
    %269 = vmatmul.mubr.f32.gmra.mrb[0].mxu0 %v150
    %v270 = vpop.f32.mrb[0].mxu0
    %v271 = vadd.f32 %v75, %v270
    %v272 = vpop.f32.mrb[0].mxu0
    %273 = vmatprep.mubr.f32.mxu0 0.0
    %274 = vmatmul.mubr.f32.gmra.mrb[0].mxu0 %v153
    %v275 = vpop.f32.mrb[0].mxu0
    %v276 = vadd.f32 %v80, %v275
    %v277 = vpop.f32.mrb[0].mxu0
    %278 = vmatprep.mubr.f32.mxu0 0.0
    %279 = vmatmul.mubr.f32.gmra.mrb[0].mxu0 %v156
    %v280 = vpop.f32.mrb[0].mxu0
    %v281 = vadd.f32 %v85, %v280
    %v282 = vpop.f32.mrb[0].mxu0
    %283 = vmatprep.mubr.f32.mxu0 0.0
    %284 = vmatmul.mubr.f32.gmra.mrb[0].mxu0 %v159
    %v285 = vpop.f32.mrb[0].mxu0
    %v286 = vadd.f32 %v90, %v285
    %v287 = vpop.f32.mrb[0].mxu0
    %288 = vmatprep.mubr.f32.mxu0 0.0
    %289 = vmatmul.mubr.f32.gmra.mrb[0].mxu0 %v162
    %v290 = vpop.f32.mrb[0].mxu0
    %v291 = vadd.f32 %v95, %v290
    %v292 = vpop.f32.mrb[0].mxu0
    %293 = vmatprep.mubr.f32.mxu0 0.0
    %294 = vmatmul.mubr.f32.gmra.mrb[0].mxu0 %v165
    %v295 = vpop.f32.mrb[0].mxu0
    %v296 = vadd.f32 %v100, %v295
    %v297 = vpop.f32.mrb[0].mxu0
    %298 = vmatprep.mubr.f32.mxu0 0.0
    %299 = vmatmul.mubr.f32.gmra.mrb[0].mxu0 %v168
    %v300 = vpop.f32.mrb[0].mxu0
    %v301 = vadd.f32 %v105, %v300
    %v302 = vpop.f32.mrb[0].mxu0
    %303 = vmatprep.mubr.f32.mxu0 0.0
    %304 = vmatmul.mubr.f32.gmra.mrb[0].mxu0 %v171
    %v305 = vpop.f32.mrb[0].mxu0
    %v306 = vadd.f32 %v110, %v305
    %v307 = vpop.f32.mrb[0].mxu0
    %308 = vmatprep.mubr.f32.mxu0 0.0
    %309 = vmatmul.mubr.f32.gmra.mrb[0].mxu0 %v174
    %v310 = vpop.f32.mrb[0].mxu0
    %v311 = vadd.f32 %v115, %v310
    %v312 = vpop.f32.mrb[0].mxu0
    %313 = vmatprep.mubr.f32.mxu0 0.0
    %314 = vmatmul.mubr.f32.gmra.mrb[0].mxu0 %v177
    %v315 = vpop.f32.mrb[0].mxu0
    %v316 = vadd.f32 %v120, %v315
    %v317 = vpop.f32.mrb[0].mxu0
    %318 = vmatprep.mubr.f32.mxu0 0.0
    %319 = vmatmul.mubr.f32.gmra.mrb[0].mxu0 %v180
    %v320 = vpop.f32.mrb[0].mxu0
    %v321 = vadd.f32 %v125, %v320
    %v322 = vpop.f32.mrb[0].mxu0
    %323 = vmatprep.mubr.f32.mxu0 0.0
    %324 = vmatmul.mubr.f32.gmra.mrb[0].mxu0 %v183
    %v325 = vpop.f32.mrb[0].mxu0
    %v326 = vadd.f32 %v130, %v325
    %v327 = vpop.f32.mrb[0].mxu0
    %328 = vmatprep.mubr.f32.mxu0 0.0
    %329 = vmatmul.mubr.f32.gmra.mrb[0].mxu0 %v186
    %v330 = vpop.f32.mrb[0].mxu0
    %v331 = vadd.f32 %v135, %v330
    %v332 = vpop.f32.mrb[0].mxu0
    %333 = vmatprep.mubr.f32.mxu0 0.0
    %334 = vmatmul.mubr.f32.gmra.mrb[0].mxu0 %v189
    %v335 = vpop.f32.mrb[0].mxu0
    %v336 = vadd.f32 %v140, %v335
    %v337 = vpop.f32.mrb[0].mxu0
    %338 = vdwg.mxu0
    %v339 = vmax.f32 %v261, 0.0
    %v340 = vmax.f32 %v266, 0.0
    %v341 = vmax.f32 %v271, 0.0
    %v342 = vmax.f32 %v276, 0.0
    %v343 = vmax.f32 %v281, 0.0
    %v344 = vmax.f32 %v286, 0.0
    %v345 = vmax.f32 %v291, 0.0
    %v346 = vmax.f32 %v296, 0.0
    %v347 = vmax.f32 %v301, 0.0
    %v348 = vmax.f32 %v306, 0.0
    %v349 = vmax.f32 %v311, 0.0
    %v350 = vmax.f32 %v316, 0.0
    %v351 = vmax.f32 %v321, 0.0
    %v352 = vmax.f32 %v326, 0.0
    %v353 = vmax.f32 %v331, 0.0
    %v354 = vmax.f32 %v336, 0.0
    %v355 = vld [vmem:[%s3] sm:$0xff]
    %v356 = vld [vmem:[%s3 + $0x8] sm:$0xff]
    %v357 = vld [vmem:[%s3 + $0x10] sm:$0xff]
    %v358 = vld [vmem:[%s3 + $0x18] sm:$0xff]
    %v359 = vld [vmem:[%s3 + $0x20] sm:$0xff]
    %v360 = vld [vmem:[%s3 + $0x28] sm:$0xff]
    %v361 = vld [vmem:[%s3 + $0x30] sm:$0xff]
    %v362 = vld [vmem:[%s3 + $0x38] sm:$0xff]
    %v363 = vld [vmem:[%s3 + $0x40] sm:$0xff]
    %v364 = vld [vmem:[%s3 + $0x48] sm:$0xff]
    %v365 = vld [vmem:[%s3 + $0x50] sm:$0xff]
    %v366 = vld [vmem:[%s3 + $0x58] sm:$0xff]
    %v367 = vld [vmem:[%s3 + $0x60] sm:$0xff]
    %v368 = vld [vmem:[%s3 + $0x68] sm:$0xff]
    %v369 = vld [vmem:[%s3 + $0x70] sm:$0xff]
    %v370 = vld [vmem:[%s3 + $0x78] sm:$0xff]
    %v371 = vld [vmem:[%s4] sm:$0xff]
    %v372 = vld [vmem:[%s4 + $0x8] sm:$0xff]
    %v373 = vld [vmem:[%s4 + $0x10] sm:$0xff]
    %v374 = vld [vmem:[%s4 + $0x18] sm:$0xff]
    %v375 = vld [vmem:[%s4 + $0x20] sm:$0xff]
    %v376 = vld [vmem:[%s4 + $0x28] sm:$0xff]
    %v377 = vld [vmem:[%s4 + $0x30] sm:$0xff]
    %v378 = vld [vmem:[%s4 + $0x38] sm:$0xff]
    %v379 = vld [vmem:[%s4 + $0x40] sm:$0xff]
    %v380 = vld [vmem:[%s4 + $0x48] sm:$0xff]
    %v381 = vld [vmem:[%s4 + $0x50] sm:$0xff]
    %v382 = vld [vmem:[%s4 + $0x58] sm:$0xff]
    %v383 = vld [vmem:[%s4 + $0x60] sm:$0xff]
    %v384 = vld [vmem:[%s4 + $0x68] sm:$0xff]
    %v385 = vld [vmem:[%s4 + $0x70] sm:$0xff]
    %v386 = vld [vmem:[%s4 + $0x78] sm:$0xff]
    %388 = vset.pattern.permute.xlu0 0
    %389 = vperm.xlu0 %388, %v371
    %v390 = vpop.permute.xlu0 %389
    %393 = vset.pattern.permute.xlu0 0
    %394 = vperm.xlu0 %393, %v372
    %v395 = vpop.permute.xlu0 %394
    %398 = vset.pattern.permute.xlu0 0
    %399 = vperm.xlu0 %398, %v373
    %v400 = vpop.permute.xlu0 %399
    %403 = vset.pattern.permute.xlu0 0
    %404 = vperm.xlu0 %403, %v374
    %v405 = vpop.permute.xlu0 %404
    %408 = vset.pattern.permute.xlu0 0
    %409 = vperm.xlu0 %408, %v375
    %v410 = vpop.permute.xlu0 %409
    %413 = vset.pattern.permute.xlu0 0
    %414 = vperm.xlu0 %413, %v376
    %v415 = vpop.permute.xlu0 %414
    %418 = vset.pattern.permute.xlu0 0
    %419 = vperm.xlu0 %418, %v377
    %v420 = vpop.permute.xlu0 %419
    %423 = vset.pattern.permute.xlu0 0
    %424 = vperm.xlu0 %423, %v378
    %v425 = vpop.permute.xlu0 %424
    %428 = vset.pattern.permute.xlu0 0
    %429 = vperm.xlu0 %428, %v379
    %v430 = vpop.permute.xlu0 %429
    %433 = vset.pattern.permute.xlu0 0
    %434 = vperm.xlu0 %433, %v380
    %v435 = vpop.permute.xlu0 %434
    %438 = vset.pattern.permute.xlu0 0
    %439 = vperm.xlu0 %438, %v381
    %v440 = vpop.permute.xlu0 %439
    %443 = vset.pattern.permute.xlu0 0
    %444 = vperm.xlu0 %443, %v382
    %v445 = vpop.permute.xlu0 %444
    %448 = vset.pattern.permute.xlu0 0
    %449 = vperm.xlu0 %448, %v383
    %v450 = vpop.permute.xlu0 %449
    %453 = vset.pattern.permute.xlu0 0
    %454 = vperm.xlu0 %453, %v384
    %v455 = vpop.permute.xlu0 %454
    %458 = vset.pattern.permute.xlu0 0
    %459 = vperm.xlu0 %458, %v385
    %v460 = vpop.permute.xlu0 %459
    %463 = vset.pattern.permute.xlu0 0
    %464 = vperm.xlu0 %463, %v386
    %v465 = vpop.permute.xlu0 %464
    %467 = vmatprep.subr.mxu0 0.0
    %468 = vmatpush1.msra.mxu0 %v339
    %469 = vmatprep.subr.mxu0 0.0
    %470 = vmatpush1.msra.mxu0 %v340
    %471 = vmatprep.subr.mxu0 0.0
    %472 = vmatpush1.msra.mxu0 %v341
    %473 = vmatprep.subr.mxu0 0.0
    %474 = vmatpush1.msra.mxu0 %v342
    %475 = vmatprep.subr.mxu0 0.0
    %476 = vmatpush1.msra.mxu0 %v343
    %477 = vmatprep.subr.mxu0 0.0
    %478 = vmatpush1.msra.mxu0 %v344
    %479 = vmatprep.subr.mxu0 0.0
    %480 = vmatpush1.msra.mxu0 %v345
    %481 = vmatprep.subr.mxu0 0.0
    %482 = vmatpush1.msra.mxu0 %v346
    %483 = vmatprep.subr.mxu0 0.0
    %484 = vmatpush1.msra.mxu0 %v347
    %485 = vmatprep.subr.mxu0 0.0
    %486 = vmatpush1.msra.mxu0 %v348
    %487 = vmatprep.subr.mxu0 0.0
    %488 = vmatpush1.msra.mxu0 %v349
    %489 = vmatprep.subr.mxu0 0.0
    %490 = vmatpush1.msra.mxu0 %v350
    %491 = vmatprep.subr.mxu0 0.0
    %492 = vmatpush1.msra.mxu0 %v351
    %493 = vmatprep.subr.mxu0 0.0
    %494 = vmatpush1.msra.mxu0 %v352
    %495 = vmatprep.subr.mxu0 0.0
    %496 = vmatpush1.msra.mxu0 %v353
    %497 = vmatprep.subr.mxu0 0.0
    %498 = vmatpush1.msra.mxu0 %v354
    %499 = vmatprep.subr.mxu0 0.0
    %500 = vmatpush1.msra.mxu0 0.0
    %501 = vmatprep.subr.mxu0 0.0
    %502 = vmatpush1.msra.mxu0 0.0
    %503 = vmatprep.subr.mxu0 0.0
    %504 = vmatpush1.msra.mxu0 0.0
    %505 = vmatprep.subr.mxu0 0.0
    %506 = vmatpush1.msra.mxu0 0.0
    %507 = vmatprep.subr.mxu0 0.0
    %508 = vmatpush1.msra.mxu0 0.0
    %509 = vmatprep.subr.mxu0 0.0
    %510 = vmatpush1.msra.mxu0 0.0
    %511 = vmatprep.subr.mxu0 0.0
    %512 = vmatpush1.msra.mxu0 0.0
    %513 = vmatprep.subr.mxu0 0.0
    %514 = vmatpush1.msra.mxu0 0.0
    %515 = vmatprep.subr.mxu0 0.0
    %516 = vmatpush1.msra.mxu0 0.0
    %517 = vmatprep.subr.mxu0 0.0
    %518 = vmatpush1.msra.mxu0 0.0
    %519 = vmatprep.subr.mxu0 0.0
    %520 = vmatpush1.msra.mxu0 0.0
    %521 = vmatprep.subr.mxu0 0.0
    %522 = vmatpush1.msra.mxu0 0.0
    %523 = vmatprep.subr.mxu0 0.0
    %524 = vmatpush1.msra.mxu0 0.0
    %525 = vmatprep.subr.mxu0 0.0
    %526 = vmatpush1.msra.mxu0 0.0
    %527 = vmatprep.subr.mxu0 0.0
    %528 = vmatpush1.msra.mxu0 0.0
    %529 = vmatprep.subr.mxu0 0.0
    %530 = vmatpush1.msra.mxu0 0.0
    %531 = vmatprep.mubr.f32.mxu0 0.0
    %532 = vmatmul.mubr.f32.gmra.mrb[0].mxu0 %v355
    %v533 = vpop.f32.mrb[0].mxu0
    %v534 = vadd.f32 %v390, %v533
    %v535 = vpop.f32.mrb[0].mxu0
    %536 = vmatprep.mubr.f32.mxu0 0.0
    %537 = vmatmul.mubr.f32.gmra.mrb[0].mxu0 %v356
    %v538 = vpop.f32.mrb[0].mxu0
    %v539 = vadd.f32 %v395, %v538
    %v540 = vpop.f32.mrb[0].mxu0
    %541 = vmatprep.mubr.f32.mxu0 0.0
    %542 = vmatmul.mubr.f32.gmra.mrb[0].mxu0 %v357
    %v543 = vpop.f32.mrb[0].mxu0
    %v544 = vadd.f32 %v400, %v543
    %v545 = vpop.f32.mrb[0].mxu0
    %546 = vmatprep.mubr.f32.mxu0 0.0
    %547 = vmatmul.mubr.f32.gmra.mrb[0].mxu0 %v358
    %v548 = vpop.f32.mrb[0].mxu0
    %v549 = vadd.f32 %v405, %v548
    %v550 = vpop.f32.mrb[0].mxu0
    %551 = vmatprep.mubr.f32.mxu0 0.0
    %552 = vmatmul.mubr.f32.gmra.mrb[0].mxu0 %v359
    %v553 = vpop.f32.mrb[0].mxu0
    %v554 = vadd.f32 %v410, %v553
    %v555 = vpop.f32.mrb[0].mxu0
    %556 = vmatprep.mubr.f32.mxu0 0.0
    %557 = vmatmul.mubr.f32.gmra.mrb[0].mxu0 %v360
    %v558 = vpop.f32.mrb[0].mxu0
    %v559 = vadd.f32 %v415, %v558
    %v560 = vpop.f32.mrb[0].mxu0
    %561 = vmatprep.mubr.f32.mxu0 0.0
    %562 = vmatmul.mubr.f32.gmra.mrb[0].mxu0 %v361
    %v563 = vpop.f32.mrb[0].mxu0
    %v564 = vadd.f32 %v420, %v563
    %v565 = vpop.f32.mrb[0].mxu0
    %566 = vmatprep.mubr.f32.mxu0 0.0
    %567 = vmatmul.mubr.f32.gmra.mrb[0].mxu0 %v362
    %v568 = vpop.f32.mrb[0].mxu0
    %v569 = vadd.f32 %v425, %v568
    %v570 = vpop.f32.mrb[0].mxu0
    %571 = vmatprep.mubr.f32.mxu0 0.0
    %572 = vmatmul.mubr.f32.gmra.mrb[0].mxu0 %v363
    %v573 = vpop.f32.mrb[0].mxu0
    %v574 = vadd.f32 %v430, %v573
    %v575 = vpop.f32.mrb[0].mxu0
    %576 = vmatprep.mubr.f32.mxu0 0.0
    %577 = vmatmul.mubr.f32.gmra.mrb[0].mxu0 %v364
    %v578 = vpop.f32.mrb[0].mxu0
    %v579 = vadd.f32 %v435, %v578
    %v580 = vpop.f32.mrb[0].mxu0
    %581 = vmatprep.mubr.f32.mxu0 0.0
    %582 = vmatmul.mubr.f32.gmra.mrb[0].mxu0 %v365
    %v583 = vpop.f32.mrb[0].mxu0
    %v584 = vadd.f32 %v440, %v583
    %v585 = vpop.f32.mrb[0].mxu0
    %586 = vmatprep.mubr.f32.mxu0 0.0
    %587 = vmatmul.mubr.f32.gmra.mrb[0].mxu0 %v366
    %v588 = vpop.f32.mrb[0].mxu0
    %v589 = vadd.f32 %v445, %v588
    %v590 = vpop.f32.mrb[0].mxu0
    %591 = vmatprep.mubr.f32.mxu0 0.0
    %592 = vmatmul.mubr.f32.gmra.mrb[0].mxu0 %v367
    %v593 = vpop.f32.mrb[0].mxu0
    %v594 = vadd.f32 %v450, %v593
    %v595 = vpop.f32.mrb[0].mxu0
    %596 = vmatprep.mubr.f32.mxu0 0.0
    %597 = vmatmul.mubr.f32.gmra.mrb[0].mxu0 %v368
    %v598 = vpop.f32.mrb[0].mxu0
    %v599 = vadd.f32 %v455, %v598
    %v600 = vpop.f32.mrb[0].mxu0
    %601 = vmatprep.mubr.f32.mxu0 0.0
    %602 = vmatmul.mubr.f32.gmra.mrb[0].mxu0 %v369
    %v603 = vpop.f32.mrb[0].mxu0
    %v604 = vadd.f32 %v460, %v603
    %v605 = vpop.f32.mrb[0].mxu0
    %606 = vmatprep.mubr.f32.mxu0 0.0
    %607 = vmatmul.mubr.f32.gmra.mrb[0].mxu0 %v370
    %v608 = vpop.f32.mrb[0].mxu0
    %v609 = vadd.f32 %v465, %v608
    %v610 = vpop.f32.mrb[0].mxu0
    %611 = vdwg.mxu0
    %v612 = vmax.f32 %v534, 0.0
    %v613 = vmax.f32 %v539, 0.0
    %v614 = vmax.f32 %v544, 0.0
    %v615 = vmax.f32 %v549, 0.0
    %v616 = vmax.f32 %v554, 0.0
    %v617 = vmax.f32 %v559, 0.0
    %v618 = vmax.f32 %v564, 0.0
    %v619 = vmax.f32 %v569, 0.0
    %v620 = vmax.f32 %v574, 0.0
    %v621 = vmax.f32 %v579, 0.0
    %v622 = vmax.f32 %v584, 0.0
    %v623 = vmax.f32 %v589, 0.0
    %v624 = vmax.f32 %v594, 0.0
    %v625 = vmax.f32 %v599, 0.0
    %v626 = vmax.f32 %v604, 0.0
    %v627 = vmax.f32 %v609, 0.0
    %v628 = vld [vmem:[%s5] sm:$0xff]
    %629 = vmatprep.subr.mxu0 0.0
    %630 = vmatpush1.msra.mxu0 %v612
    %631 = vmatprep.subr.mxu0 0.0
    %632 = vmatpush1.msra.mxu0 %v613
    %633 = vmatprep.subr.mxu0 0.0
    %634 = vmatpush1.msra.mxu0 %v614
    %635 = vmatprep.subr.mxu0 0.0
    %636 = vmatpush1.msra.mxu0 %v615
    %637 = vmatprep.subr.mxu0 0.0
    %638 = vmatpush1.msra.mxu0 %v616
    %639 = vmatprep.subr.mxu0 0.0
    %640 = vmatpush1.msra.mxu0 %v617
    %641 = vmatprep.subr.mxu0 0.0
    %642 = vmatpush1.msra.mxu0 %v618
    %643 = vmatprep.subr.mxu0 0.0
    %644 = vmatpush1.msra.mxu0 %v619
    %645 = vmatprep.subr.mxu0 0.0
    %646 = vmatpush1.msra.mxu0 %v620
    %647 = vmatprep.subr.mxu0 0.0
    %648 = vmatpush1.msra.mxu0 %v621
    %649 = vmatprep.subr.mxu0 0.0
    %650 = vmatpush1.msra.mxu0 %v622
    %651 = vmatprep.subr.mxu0 0.0
    %652 = vmatpush1.msra.mxu0 %v623
    %653 = vmatprep.subr.mxu0 0.0
    %654 = vmatpush1.msra.mxu0 %v624
    %655 = vmatprep.subr.mxu0 0.0
    %656 = vmatpush1.msra.mxu0 %v625
    %657 = vmatprep.subr.mxu0 0.0
    %658 = vmatpush1.msra.mxu0 %v626
    %659 = vmatprep.subr.mxu0 0.0
    %660 = vmatpush1.msra.mxu0 %v627
    %661 = vmatprep.subr.mxu0 0.0
    %662 = vmatpush1.msra.mxu0 0.0
    %663 = vmatprep.subr.mxu0 0.0
    %664 = vmatpush1.msra.mxu0 0.0
    %665 = vmatprep.subr.mxu0 0.0
    %666 = vmatpush1.msra.mxu0 0.0
    %667 = vmatprep.subr.mxu0 0.0
    %668 = vmatpush1.msra.mxu0 0.0
    %669 = vmatprep.subr.mxu0 0.0
    %670 = vmatpush1.msra.mxu0 0.0
    %671 = vmatprep.subr.mxu0 0.0
    %672 = vmatpush1.msra.mxu0 0.0
    %673 = vmatprep.subr.mxu0 0.0
    %674 = vmatpush1.msra.mxu0 0.0
    %675 = vmatprep.subr.mxu0 0.0
    %676 = vmatpush1.msra.mxu0 0.0
    %677 = vmatprep.subr.mxu0 0.0
    %678 = vmatpush1.msra.mxu0 0.0
    %679 = vmatprep.subr.mxu0 0.0
    %680 = vmatpush1.msra.mxu0 0.0
    %681 = vmatprep.subr.mxu0 0.0
    %682 = vmatpush1.msra.mxu0 0.0
    %683 = vmatprep.subr.mxu0 0.0
    %684 = vmatpush1.msra.mxu0 0.0
    %685 = vmatprep.subr.mxu0 0.0
    %686 = vmatpush1.msra.mxu0 0.0
    %687 = vmatprep.subr.mxu0 0.0
    %688 = vmatpush1.msra.mxu0 0.0
    %689 = vmatprep.subr.mxu0 0.0
    %690 = vmatpush1.msra.mxu0 0.0
    %691 = vmatprep.subr.mxu0 0.0
    %692 = vmatpush1.msra.mxu0 0.0
    %693 = vmatprep.mubr.f32.mxu0 0.0
    %694 = vmatmul.mubr.f32.gmra.mrb[0].mxu0 %v628
    %v695 = vpop.f32.mrb[0].mxu0
    %v696 = vadd.f32 0.0, %v695
    %v697 = vpop.f32.mrb[0].mxu0
    %698 = vdwg.mxu0
    %v699 = vld [vmem:[#allocation2] sm:$0x1]
    %701 = vset.pattern.permute.xlu0 0
    %702 = vperm.xlu0 %701, %v699
    %v703 = vpop.permute.xlu0 %702
    %v705 = vlaneseq
    %v706 = vshrl.u32 %v705, 7
    %v707 = vsub.s32 0, %v706
    %v708 = vrot.slane %v703, %v707
    %v709 = vadd.f32 %v696, %v708
    %v710 = vxor.u32 %v709, 2147483648
    %v711 = vmul.f32 %v710, 1.442695
    %v712 = vpow.pop %v711
    %v713 = vadd.f32 %v712, 1.0
    %v714 = vrcp.pop %v713
    %v715 = vmul.f32 1.0, %v714
    %vm716 = vcmask 57344
    %717 = vst.msk [vmem:[#allocation3] sm:$0x1] %vm716, %v715
    // Predicated region
    $region30: #{tpu_custom_call.1} parent=1 // pred_check
      _
    $region31: #{tpu_custom_call.1} parent=1 // pred_check_branch
      %719 = sbr.rel (0) target = $region33
    $region32: #{tpu_custom_call.1} parent=1 // pred_region
      %s721 = ssub.s32 16, 16
      %722 = vsyncadd [#allocation4], %s721
      %s724 = sshll.u32 [#allocation3], 4
      %s725 = int_to_ptr.vmem [resolvable:$true] %s724
      %727 = dma.vmem_to_hbm [thread:$0]  %s725, 16, %s7, [#allocation4]
    $region33: #{tpu_custom_call.1} parent=1 // pred_fallthru
      _
    // Predicated region
    $region34: #{tpu_custom_call.1} parent=1 // pred_check
      _
    $region35: #{tpu_custom_call.1} parent=1 // pred_check_branch
      %729 = sbr.rel (0) target = $region37
    $region36: #{tpu_custom_call.1} parent=1 // pred_region
      %730 = dma.done [#allocation4], 16
    $region37: #{tpu_custom_call.1} parent=1 // pred_fallthru
      _
    %731 = vsyncpa [#allocation4], 1

</llo_original>
